<compile_context>
chip_gen: v7x
topology: tpu7x:2x2x1
jax: 0.10.0
libtpu: 0.0.40
codegen_flags: <defaults>
</compile_context>

<pallas_src>
import functools

import jax
import jax.numpy as jnp
from jax import lax
from jax.experimental import pallas as pl
from jax.experimental.pallas import tpu as pltpu

_MAX_TM = 256 * 1024         # hard cap on the lane tile (columns per grid step)
_VMEM_BLOCK_FRACTION = 0.35  # fraction of physical VMEM spent on pipelined blocks


def _vmem_capacity_bytes():
    try:
        return int(pltpu.get_tpu_info().vmem_capacity_bytes)
    except Exception:        # no TPU visible at trace time -> assume smallest (v7x)
        return 64 << 20


def _dice_kernel(pred_ref, targ_ref, out_ref, *, m_valid, num_inner):
    """Per-tile body.

    pred_ref : (C, TM) float  logits tile (class on sublanes, spatial on lanes)
    targ_ref : (1, TM) int    class labels tile (native dtype, upcast here)
    out_ref  : (1, TM) f32    per-(sample, split) partial intersection; resident
                              across the inner (arbitrary) grid axis.
    """
    sb = pl.program_id(1)                      # M-split index (outer, "parallel")
    ib = pl.program_id(2)                      # M-tile index  (inner, "arbitrary")
    c, tm = pred_ref.shape
    g = sb * num_inner + ib                    # nominal global tile index
    block_start = g * tm

    @pl.when(ib == 0)
    def _():
        out_ref[...] = jnp.zeros_like(out_ref)

    p = pred_ref[...].astype(jnp.float32)      # (C, TM)
    t = targ_ref[...].astype(jnp.int32)        # (1, TM)

    # Softmax over the class axis; only the target-class probability matters
    # for the intersection (softmax itself sums to 1 per column).
    mx = jnp.max(p, axis=0, keepdims=True)                     # (1, TM)
    e = jnp.exp(p - mx)                                        # (C, TM)
    denom = jnp.sum(e, axis=0, keepdims=True)                  # (1, TM), in [1, C]

    cls = lax.broadcasted_iota(jnp.int32, (c, tm), 0)
    numer = jnp.sum(jnp.where(cls == t, e, 0.0), axis=0, keepdims=True)

    # Exact reciprocal (EUP path); approx=True would risk the 1e-5 tolerance
    # since per-voxel errors accumulate into the global sum.
    ratio = numer * pl.reciprocal(denom, approx=False)         # (1, TM)

    # Interior tiles: plain accumulate, no mask work.
    @pl.when(block_start + tm <= m_valid)
    def _():
        out_ref[...] += ratio

    # Ragged / overflow tiles: zero columns beyond the real spatial extent.
    # (The index map clamps the DMA so loads are in-bounds; garbage columns --
    # including any NaN they produce -- are discarded by the select, and no
    # cross-lane reduce happens before the mask.)
    @pl.when(block_start + tm > m_valid)
    def _():
        cols = block_start + lax.broadcasted_iota(jnp.int32, (1, tm), 1)
        out_ref[...] += jnp.where(cols < m_valid, ratio, 0.0)


def dice_loss(predictions, targets, smooth=1e-05, block_m=None):
    """predictions: (N, C, D, H, W) float; targets: (N, D, H, W) int in [0, C)."""
    n, c, d, h, w = predictions.shape
    m = d * h * w

    # Free reshapes only -- no transpose, no padding copies.  Targets stream in
    # their native (narrowest) dtype; only 64-bit labels get narrowed.
    pred = predictions.reshape(n, c, m)
    if targets.dtype.itemsize > 4:
        targets = targets.astype(jnp.int32)
    targ = targets.reshape(n, 1, m)

    vmem_cap = _vmem_capacity_bytes()
    # Bytes per lane column: double-buffered pred + targ blocks plus the
    # resident (1, TM) f32 accumulator (counted x2 for safety).
    bytes_per_col = 2 * (c * pred.dtype.itemsize + targ.dtype.itemsize) + 2 * 4

    if m <= 128:
        tm = m                                   # full-dim lane block
    else:
        m_ceil = ((m + 127) // 128) * 128
        if block_m is None:
            budget = int(vmem_cap * _VMEM_BLOCK_FRACTION)
            tm = (budget // bytes_per_col) // 128 * 128
            tm = max(128, min(_MAX_TM, tm))
        else:
            tm = max(128, (block_m // 128) * 128)
        tm = min(tm, m_ceil)
    num_m_blocks = pl.cdiv(m, tm)

    # v7x has 2 TensorCores; with a single sample the batch axis alone cannot
    # feed both, so split the M tiles across a second "parallel" axis.  Each
    # (sample, split) pair owns its own lane accumulator.  Harmless on the
    # single-core generations (v5e/v6e).
    n_split = 2 if (n == 1 and num_m_blocks >= 2) else 1
    num_inner = pl.cdiv(num_m_blocks, n_split)

    def in_index(nb, sb, ib):
        # Clamp the (at most one) overflow tile of the last split; the kernel's
        # column mask zeroes its contribution, so the re-read is never counted.
        g = jnp.minimum(sb * num_inner + ib, num_m_blocks - 1)
        return (nb, 0, g)

    kernel = functools.partial(_dice_kernel, m_valid=m, num_inner=num_inner)

    blocks_bytes = bytes_per_col * tm
    vmem_limit = int(max(vmem_cap // 2, blocks_bytes + (8 << 20)))

    partial_sums = pl.pallas_call(
        kernel,
        out_shape=jax.ShapeDtypeStruct((n * n_split, 1, tm), jnp.float32),
        grid_spec=pltpu.PrefetchScalarGridSpec(
            num_scalar_prefetch=0,
            grid=(n, n_split, num_inner),
            in_specs=[
                pl.BlockSpec((pl.Squeezed(), c, tm), in_index),
                pl.BlockSpec((pl.Squeezed(), 1, tm), in_index),
            ],
            out_specs=pl.BlockSpec(
                (pl.Squeezed(), 1, tm),
                lambda nb, sb, ib: (nb * n_split + sb, 0, 0)),
        ),
        compiler_params=pltpu.CompilerParams(
            dimension_semantics=("parallel", "parallel", "arbitrary"),
            vmem_limit_bytes=vmem_limit,
        ),
    )(pred, targ)

    # Epilogue (trivial): softmax and one-hot each sum to exactly 1 per voxel,
    # so pred.sum() + onehot.sum() == 2 * N * D * H * W (labels must be in [0, C)).
    intersection = jnp.sum(partial_sums)
    total = float(n) * float(m)
    s = jnp.float32(smooth)
    dice = (2.0 * intersection + s) / (jnp.float32(2.0 * total) + s)
    return 1.0 - dice


def _dice_loss_ref(predictions, targets, smooth=1e-05):
    c = predictions.shape[1]
    p = jax.nn.softmax(predictions.astype(jnp.float32), axis=1)
    onehot = jax.nn.one_hot(targets, c, dtype=jnp.float32)            # (N,D,H,W,C)
    onehot = jnp.transpose(onehot, (0, 4, 1, 2, 3))                   # (N,C,D,H,W)
    inter = jnp.sum(p * onehot)
    dice = (2.0 * inter + smooth) / (jnp.sum(p) + jnp.sum(onehot) + smooth)
    return 1.0 - dice


if __name__ == "__main__":
    key = jax.random.PRNGKey(0)

    test_cases = [
        # (N, C, D, H, W, block_m, target_dtype)
        (2, 4, 4, 8, 8, None, jnp.int32),    # primary shape, single even tile
        (1, 3, 3, 5, 7, None, jnp.int32),    # M=105 < 128 -> full-dim lane block
        (2, 5, 2, 9, 11, 128, jnp.int32),    # M=198 -> two tiles, ragged last tile
        (2, 5, 2, 9, 11, None, jnp.int32),   # M=198 -> single overhanging tile
        (1, 4, 8, 16, 16, 512, jnp.int32),   # N=1 -> M split across 2 parallel halves
        (1, 5, 3, 9, 13, 128, jnp.int8),     # N=1, odd tile count -> clamp path; int8 labels
    ]
    for idx, (N, C, D, H, W, bm, tdt) in enumerate(test_cases):
        k1, k2 = jax.random.split(jax.random.fold_in(key, idx))
        predictions = jax.random.normal(k1, (N, C, D, H, W), dtype=jnp.float32)
        targets = jax.random.randint(k2, (N, D, H, W), 0, C, dtype=jnp.int32).astype(tdt)

        loss = jax.block_until_ready(dice_loss(predictions, targets, block_m=bm))
        ref = jax.block_until_ready(_dice_loss_ref(predictions, targets))
        assert jnp.allclose(loss, ref, atol=1e-5, rtol=1e-5), (idx, loss, ref)

    print("KERNEL_OK")
</pallas_src>

<mosaic_0001>
module attributes {stable_mosaic.version = 11 : i64} {
  func.func @_dice_kernel(%arg0: i32, %arg1: i32, %arg2: i32, %arg3: memref<1x4x256xf32, #tpu.memory_space<vmem>>, %arg4: memref<1x1x256xi32, #tpu.memory_space<vmem>>, %arg5: memref<1x1x256xf32, #tpu.memory_space<vmem>>) attributes {dimension_semantics = [#tpu.dimension_semantics<parallel>, #tpu.dimension_semantics<parallel>, #tpu.dimension_semantics<arbitrary>], iteration_bounds = array<i64: 2, 1, 1>, scalar_prefetch = 0 : i64, scratch_operands = 0 : i64, tpu.core_type = #tpu.core_type<tc>, window_params = [{transform_indices = @transform_0, window_bounds = array<i64: 1, 4, 256>}, {transform_indices = @transform_1, window_bounds = array<i64: 1, 1, 256>}, {transform_indices = @transform_2, window_bounds = array<i64: 1, 1, 256>}]} {
    %c1_i32 = arith.constant 1 : i32
    %0 = arith.muli %arg1, %c1_i32 : i32
    %1 = arith.addi %0, %arg2 : i32
    %c256_i32 = arith.constant 256 : i32
    %2 = arith.muli %1, %c256_i32 : i32
    %c0_i32 = arith.constant 0 : i32
    %3 = arith.cmpi eq, %arg2, %c0_i32 : i32
    %4 = arith.extui %3 : i1 to i32
    %c0_i32_0 = arith.constant 0 : i32
    %5 = arith.cmpi ne, %4, %c0_i32_0 : i32
    scf.if %5 {
      %cst_15 = arith.constant 0.000000e+00 : f32
      %34 = vector.broadcast %cst_15 : f32 to vector<1x256xf32>
      %c0_16 = arith.constant 0 : index
      %c0_17 = arith.constant 0 : index
      %c0_18 = arith.constant 0 : index
      %35 = vector.load %arg5[%c0_16, %c0_17, %c0_18] : memref<1x1x256xf32, #tpu.memory_space<vmem>>, vector<1x1x256xf32>
      %36 = vector.shape_cast %35 : vector<1x1x256xf32> to vector<1x256xf32>
      %37 = vector.shape_cast %34 : vector<1x256xf32> to vector<1x1x256xf32>
      tpu.vector_store %arg5[%c0_16, %c0_17, %c0_18], %37 {strides = array<i32>} : memref<1x1x256xf32, #tpu.memory_space<vmem>>, vector<1x1x256xf32>,
    } else {
    }
    %c0 = arith.constant 0 : index
    %c0_1 = arith.constant 0 : index
    %c0_2 = arith.constant 0 : index
    %6 = vector.load %arg3[%c0, %c0_1, %c0_2] : memref<1x4x256xf32, #tpu.memory_space<vmem>>, vector<1x4x256xf32>
    %7 = vector.shape_cast %6 : vector<1x4x256xf32> to vector<4x256xf32>
    %c0_3 = arith.constant 0 : index
    %c0_4 = arith.constant 0 : index
    %c0_5 = arith.constant 0 : index
    %8 = vector.load %arg4[%c0_3, %c0_4, %c0_5] : memref<1x1x256xi32, #tpu.memory_space<vmem>>, vector<1x1x256xi32>
    %9 = vector.shape_cast %8 : vector<1x1x256xi32> to vector<1x256xi32>
    %cst = arith.constant dense<0xFF800000> : vector<256xf32>
    %10 = vector.multi_reduction <maximumf>, %7, %cst [0] : vector<4x256xf32> to vector<256xf32>
    %11 = vector.shape_cast %10 : vector<256xf32> to vector<1x256xf32>
    %12 = vector.broadcast %11 : vector<1x256xf32> to vector<4x256xf32>
    %13 = arith.subf %7, %12 : vector<4x256xf32>
    %14 = math.exp %13 : vector<4x256xf32>
    %cst_6 = arith.constant dense<0.000000e+00> : vector<256xf32>
    %15 = vector.multi_reduction <add>, %14, %cst_6 [0] : vector<4x256xf32> to vector<256xf32>
    %16 = vector.shape_cast %15 : vector<256xf32> to vector<1x256xf32>
    %17 = tpu.iota {dimensions = array<i32: 0>} : vector<4x256xi32>
    %18 = vector.broadcast %9 : vector<1x256xi32> to vector<4x256xi32>
    %19 = arith.cmpi eq, %17, %18 : vector<4x256xi32>
    %cst_7 = arith.constant 0.000000e+00 : f32
    %20 = vector.broadcast %cst_7 : f32 to vector<4x256xf32>
    %21 = arith.select %19, %14, %20 : vector<4x256xi1>, vector<4x256xf32>
    %cst_8 = arith.constant dense<0.000000e+00> : vector<256xf32>
    %22 = vector.multi_reduction <add>, %21, %cst_8 [0] : vector<4x256xf32> to vector<256xf32>
    %23 = vector.shape_cast %22 : vector<256xf32> to vector<1x256xf32>
    %24 = tpu.reciprocal %16 : vector<1x256xf32> -> vector<1x256xf32>
    %25 = arith.mulf %23, %24 : vector<1x256xf32>
    %c256_i32_9 = arith.constant 256 : i32
    %26 = arith.addi %2, %c256_i32_9 : i32
    %c256_i32_10 = arith.constant 256 : i32
    %27 = arith.cmpi sle, %26, %c256_i32_10 : i32
    %28 = arith.extui %27 : i1 to i32
    %c0_i32_11 = arith.constant 0 : i32
    %29 = arith.cmpi ne, %28, %c0_i32_11 : i32
    scf.if %29 {
      %c0_15 = arith.constant 0 : index
      %c0_16 = arith.constant 0 : index
      %c0_17 = arith.constant 0 : index
      %34 = vector.load %arg5[%c0_15, %c0_16, %c0_17] : memref<1x1x256xf32, #tpu.memory_space<vmem>>, vector<1x1x256xf32>
      %35 = vector.shape_cast %34 : vector<1x1x256xf32> to vector<1x256xf32>
      %36 = arith.addf %35, %25 : vector<1x256xf32>
      %c0_18 = arith.constant 0 : index
      %c0_19 = arith.constant 0 : index
      %c0_20 = arith.constant 0 : index
      %37 = vector.load %arg5[%c0_18, %c0_19, %c0_20] : memref<1x1x256xf32, #tpu.memory_space<vmem>>, vector<1x1x256xf32>
      %38 = vector.shape_cast %37 : vector<1x1x256xf32> to vector<1x256xf32>
      %39 = vector.shape_cast %36 : vector<1x256xf32> to vector<1x1x256xf32>
      tpu.vector_store %arg5[%c0_18, %c0_19, %c0_20], %39 {strides = array<i32>} : memref<1x1x256xf32, #tpu.memory_space<vmem>>, vector<1x1x256xf32>,
    } else {
    }
    %c256_i32_12 = arith.constant 256 : i32
    %30 = arith.addi %2, %c256_i32_12 : i32
    %c256_i32_13 = arith.constant 256 : i32
    %31 = arith.cmpi sgt, %30, %c256_i32_13 : i32
    %32 = arith.extui %31 : i1 to i32
    %c0_i32_14 = arith.constant 0 : i32
    %33 = arith.cmpi ne, %32, %c0_i32_14 : i32
    scf.if %33 {
      %34 = tpu.iota {dimensions = array<i32: 1>} : vector<1x256xi32>
      %35 = vector.broadcast %2 : i32 to vector<1x256xi32>
      %36 = arith.addi %35, %34 : vector<1x256xi32>
      %c0_15 = arith.constant 0 : index
      %c0_16 = arith.constant 0 : index
      %c0_17 = arith.constant 0 : index
      %37 = vector.load %arg5[%c0_15, %c0_16, %c0_17] : memref<1x1x256xf32, #tpu.memory_space<vmem>>, vector<1x1x256xf32>
      %38 = vector.shape_cast %37 : vector<1x1x256xf32> to vector<1x256xf32>
      %c256_i32_18 = arith.constant 256 : i32
      %39 = vector.broadcast %c256_i32_18 : i32 to vector<1x256xi32>
      %40 = arith.cmpi slt, %36, %39 : vector<1x256xi32>
      %cst_19 = arith.constant 0.000000e+00 : f32
      %41 = vector.broadcast %cst_19 : f32 to vector<1x256xf32>
      %42 = arith.select %40, %25, %41 : vector<1x256xi1>, vector<1x256xf32>
      %43 = arith.addf %38, %42 : vector<1x256xf32>
      %c0_20 = arith.constant 0 : index
      %c0_21 = arith.constant 0 : index
      %c0_22 = arith.constant 0 : index
      %44 = vector.load %arg5[%c0_20, %c0_21, %c0_22] : memref<1x1x256xf32, #tpu.memory_space<vmem>>, vector<1x1x256xf32>
      %45 = vector.shape_cast %44 : vector<1x1x256xf32> to vector<1x256xf32>
      %46 = vector.shape_cast %43 : vector<1x256xf32> to vector<1x1x256xf32>
      tpu.vector_store %arg5[%c0_20, %c0_21, %c0_22], %46 {strides = array<i32>} : memref<1x1x256xf32, #tpu.memory_space<vmem>>, vector<1x1x256xf32>,
    } else {
    }
    return
  }
  func.func @transform_0(%arg0: i32, %arg1: i32, %arg2: i32) -> (i32, i32, i32) {
    %c1_i32 = arith.constant 1 : i32
    %0 = arith.muli %arg1, %c1_i32 : i32
    %1 = arith.addi %0, %arg2 : i32
    %c0_i32 = arith.constant 0 : i32
    %2 = arith.minsi %1, %c0_i32 : i32
    %c0_i32_0 = arith.constant 0 : i32
    %c0_i32_1 = arith.constant 0 : i32
    return %arg0, %c0_i32_0, %2 : i32, i32, i32
  }
  func.func @transform_1(%arg0: i32, %arg1: i32, %arg2: i32) -> (i32, i32, i32) {
    %c1_i32 = arith.constant 1 : i32
    %0 = arith.muli %arg1, %c1_i32 : i32
    %1 = arith.addi %0, %arg2 : i32
    %c0_i32 = arith.constant 0 : i32
    %2 = arith.minsi %1, %c0_i32 : i32
    %c0_i32_0 = arith.constant 0 : i32
    %c0_i32_1 = arith.constant 0 : i32
    return %arg0, %c0_i32_0, %2 : i32, i32, i32
  }
  func.func @transform_2(%arg0: i32, %arg1: i32, %arg2: i32) -> (i32, i32, i32) {
    %c1_i32 = arith.constant 1 : i32
    %0 = arith.muli %arg0, %c1_i32 : i32
    %1 = arith.addi %0, %arg1 : i32
    %c0_i32 = arith.constant 0 : i32
    %c0_i32_0 = arith.constant 0 : i32
    %c0_i32_1 = arith.constant 0 : i32
    return %1, %c0_i32, %c0_i32_0 : i32, i32, i32
  }
}

</mosaic_0001>

<llo_original>
// kernel: tpu_custom_call.1
$region0: #{tpu_custom_call.1}
  #allocation0 [shape = 'u32[]', space=smem, size = 0x4, offset = 0x4, fixed_abs, tag = 'smem constant byte address 0x4 - core index']
  #allocation1 [shape = 'u32[144,128]{1,0:T(1,128)}', space=vmem, size = 0x12000, scoped, tag = 'internal scratch']
  %s0 = inlined_call_operand.hbm [shape: f32[2,4,256], index: 0, kind: input, shape index: {}]
  %s1 = inlined_call_operand.hbm [shape: s32[2,1,256], index: 1, kind: input, shape index: {}]
  %s2 = inlined_call_operand.hbm [shape: f32[2,1,256], index: 2, kind: output, shape index: {}]
  %s3 = sld [smem:[#allocation0]]
  $region61: #{tpu_custom_call.1} parent=0
    _
  %s5 = ssub.s32 1, %s3
  %s6 = scalar_select 0, %s5, %s3
  $region1: #{tpu_custom_call.1} parent=0
    #allocation2 [shape = 'u8[8192]{0}', space=vmem, size = 0x2000, scoped, tag = 'input window, operand 0']
    #allocation3 [shape = 's32[2]{0}', space=sflag, size = 0x8, scoped, tag = 'scoped memory for tpu_custom_call.1']
    #allocation4 [shape = 's32[2]{0}', space=sflag, size = 0x8, scoped, tag = 'scoped memory for tpu_custom_call.1']
    #allocation5 [shape = 'u8[2048]{0}', space=vmem, size = 0x800, scoped, tag = 'input window, operand 1']
    #allocation6 [shape = 's32[2]{0}', space=sflag, size = 0x8, scoped, tag = 'scoped memory for tpu_custom_call.1']
    #allocation7 [shape = 'u8[2048]{0}', space=vmem, size = 0x800, scoped, tag = 'output window, operand 0']
    %7 = vsyncpa [#allocation3], 0
    %s8 = scalar_lea.sflag [#allocation3], 1
    %9 = vsyncpa %s8, 0
    %10 = vsyncpa [#allocation6], 0
    %s11 = scalar_lea.sflag [#allocation6], 1
    %12 = vsyncpa %s11, 0
    %13 = vsyncpa [#allocation4], 0
    %s14 = scalar_lea.sflag [#allocation4], 1
    %15 = vsyncpa %s14, 0
    loop: start=0, step=1, limit=4
    $region2: #{tpu_custom_call.1} parent=1 // loop_pre_header
      _
    $region3: #{tpu_custom_call.1} parent=1 // loop_header
      %s17 = sphi 0, %s21
      %p18 = scmp.ge.s32.totalorder %s17, 4
      %s24 = sphi 0, %s43
      %s25 = sphi 0, %s39
      %s26 = sphi 0, %s35
      %s27 = sphi 0, %s24
      %s28 = sphi 0, %s25
      %s29 = sphi 0, %s26
      %s30 = sphi 0, %s27
      %s31 = sphi 0, %s28
      %s32 = sphi 0, %s29
      %s54 = sphi 0, %s56
      %s57 = sphi 0, %s54
      %s58 = sphi 0, %s57
      %s74 = sphi 0, %s58
      %s88 = sphi 0, %s90
      %s91 = sphi 0, %s88
      %s92 = sphi 0, %s91
      %s108 = sphi 0, %s92
      %s116 = sphi 0, %s118
      %s119 = sphi 0, %s116
      %s120 = sphi 0, %s119
      %s136 = sphi 0, %s120
    $region4: #{tpu_custom_call.1} parent=1 // loop_header_branch
      %20 = sbr.rel (%p18) target = $region8
    $region5: #{tpu_custom_call.1} parent=1 // loop_body
      %s22 = ssub.s32 %s17, 1
      %s23 = ssub.s32 %s17, 2
      %s33 = sadd.s32 1, %s26
      %p34 = scmp.ge.s32.totalorder %s33, 1
      %s35 = scalar_select %p34, 0, %s33
      %s36 = sadd.s32 1, %s25
      %s37 = scalar_select %p34, %s36, %s25
      %p38 = scmp.ge.s32.totalorder %s37, 1
      %s39 = scalar_select %p38, 0, %s37
      %s40 = sadd.s32 1, %s24
      %s41 = scalar_select %p38, %s40, %s24
      %p42 = scmp.ge.s32.totalorder %s41, 2
      %s43 = scalar_select %p42, 0, %s41
      %s44 = sadd.s32 %s25, %s26
      %p45 = scmp.lt.s32.totalorder %s44, 0
      %s46 = scalar_select %p45, %s44, 0
      %s47 = sadd.s32 %s39, %s35
      %p48 = scmp.lt.s32.totalorder %s47, 0
      %s49 = scalar_select %p48, %s47, 0
      %s50 = ssub.s32 %s24, %s43
      %s51 = ssub.s32 %s46, %s49
      %s52 = sor.u32 %s50, %s51
      %p53 = scmp.eq.s32.totalorder %s52, 0
      %s55 = sadd.s32 %s54, 1
      %s56 = scalar_select %p53, %s54, %s55
      %p59 = pneg %p53
      %p60 = scmp.eq.s32.totalorder %s17, 1
      %p61 = por %p59, %p60
      %p62 = scmp.ne.s32.totalorder %s54, %s57
      %p63 = scmp.eq.s32.totalorder %s17, 0
      %p64 = por %p62, %p63
      %p65 = scmp.ne.s32.totalorder %s54, %s57
      %p66 = scmp.eq.s32.totalorder %s22, 1
      %p67 = por %p65, %p66
      %p68 = scmp.ne.s32.totalorder %s57, %s58
      %p69 = scmp.eq.s32.totalorder %s22, 0
      %p70 = por %p68, %p69
      %p71 = scmp.ne.s32.totalorder %s57, %s58
      %p72 = scmp.eq.s32.totalorder %s23, 1
      %p73 = por %p71, %p72
      %p75 = scmp.ne.s32.totalorder %s58, %s74
      %p76 = scmp.eq.s32.totalorder %s23, 0
      %p77 = por %p75, %p76
      %s78 = sadd.s32 %s25, %s26
      %p79 = scmp.lt.s32.totalorder %s78, 0
      %s80 = scalar_select %p79, %s78, 0
      %s81 = sadd.s32 %s39, %s35
      %p82 = scmp.lt.s32.totalorder %s81, 0
      %s83 = scalar_select %p82, %s81, 0
      %s84 = ssub.s32 %s24, %s43
      %s85 = ssub.s32 %s80, %s83
      %s86 = sor.u32 %s84, %s85
      %p87 = scmp.eq.s32.totalorder %s86, 0
      %s89 = sadd.s32 %s88, 1
      %s90 = scalar_select %p87, %s88, %s89
      %p93 = pneg %p87
      %p94 = scmp.eq.s32.totalorder %s17, 1
      %p95 = por %p93, %p94
      %p96 = scmp.ne.s32.totalorder %s88, %s91
      %p97 = scmp.eq.s32.totalorder %s17, 0
      %p98 = por %p96, %p97
      %p99 = scmp.ne.s32.totalorder %s88, %s91
      %p100 = scmp.eq.s32.totalorder %s22, 1
      %p101 = por %p99, %p100
      %p102 = scmp.ne.s32.totalorder %s91, %s92
      %p103 = scmp.eq.s32.totalorder %s22, 0
      %p104 = por %p102, %p103
      %p105 = scmp.ne.s32.totalorder %s91, %s92
      %p106 = scmp.eq.s32.totalorder %s23, 1
      %p107 = por %p105, %p106
      %p109 = scmp.ne.s32.totalorder %s92, %s108
      %p110 = scmp.eq.s32.totalorder %s23, 0
      %p111 = por %p109, %p110
      %s112 = sadd.s32 %s24, %s25
      %s113 = sadd.s32 %s43, %s39
      %s114 = ssub.s32 %s112, %s113
      %p115 = scmp.eq.s32.totalorder %s114, 0
      %s117 = sadd.s32 %s116, 1
      %s118 = scalar_select %p115, %s116, %s117
      %p121 = pneg %p115
      %p122 = scmp.eq.s32.totalorder %s17, 1
      %p123 = por %p121, %p122
      %p124 = scmp.ne.s32.totalorder %s116, %s119
      %p125 = scmp.eq.s32.totalorder %s17, 0
      %p126 = por %p124, %p125
      %p127 = scmp.ne.s32.totalorder %s116, %s119
      %p128 = scmp.eq.s32.totalorder %s22, 1
      %p129 = por %p127, %p128
      %p130 = scmp.ne.s32.totalorder %s119, %s120
      %p131 = scmp.eq.s32.totalorder %s22, 0
      %p132 = por %p130, %p131
      %p133 = scmp.ne.s32.totalorder %s119, %s120
      %p134 = scmp.eq.s32.totalorder %s23, 1
      %p135 = por %p133, %p134
      %p137 = scmp.ne.s32.totalorder %s120, %s136
      %p138 = scmp.eq.s32.totalorder %s23, 0
      %p139 = por %p137, %p138
      %p140 = scmp.le.s32.totalorder 1, %s17
      %p141 = scmp.lt.s32.totalorder %s17, 3
      %p142 = pnand %p140, %p141
      %p143 = pneg %p142
      // Predicated region
      $region9: #{tpu_custom_call.1} parent=5 // pred_check
        _
      $region10: #{tpu_custom_call.1} parent=5 // pred_check_branch
        %145 = sbr.rel (%p142) target = $region12
      $region11: #{tpu_custom_call.1} parent=5 // pred_region
        %s146 = ssub.s32 %s17, 1
      $region12: #{tpu_custom_call.1} parent=5 // pred_fallthru
        _
      %p147 = scmp.lt.s32.totalorder %s17, 2
      // Predicated region
      $region13: #{tpu_custom_call.1} parent=5 // pred_check
        %p148 = pneg %p147
      $region14: #{tpu_custom_call.1} parent=5 // pred_check_branch
        %150 = sbr.rel (%p148) target = $region16
      $region15: #{tpu_custom_call.1} parent=5 // pred_region
        // Predicated region
        $region17: #{tpu_custom_call.1} parent=15 // pred_check
          %p151 = pneg %p64
        $region18: #{tpu_custom_call.1} parent=15 // pred_check_branch
          %153 = sbr.rel (%p151) target = $region20
        $region19: #{tpu_custom_call.1} parent=15 // pred_region
          %s154 = sand.u32 %s54, 1
          %s155 = scalar_lea.sflag [#allocation3], %s154
          %s156 = sand.u32 %s54, 1
          %s157 = smul.addr %s156, 8
          %s158 = scalar_lea.vmem [#allocation2], %s157
          %s159 = sadd.s32 %s25, %s26
          %p160 = scmp.lt.s32.totalorder %s159, 0
          %s161 = scalar_select %p160, %s159, 0
          %s162 = smul.u32 2, %s161
          %s164 = ssub.s32 128, 128
          %165 = vsyncadd %s155, %s164
          %s166 = smul.addr %s24, 2
          %s167 = sadd.s32 %s162, %s166
          %s168 = smul.addr %s167, 64
          %s169 = scalar_lea.hbm %s0, %s168
          %s171 = sshll.u32 %s158, 4
          %s172 = int_to_ptr.vmem [resolvable:$true] %s171
          %174 = dma.hbm_to_vmem [thread:$0]  %s169, 128, %s172, %s155
        $region20: #{tpu_custom_call.1} parent=15 // pred_fallthru
          _
        // Predicated region
        $region21: #{tpu_custom_call.1} parent=15 // pred_check
          %p175 = pneg %p98
        $region22: #{tpu_custom_call.1} parent=15 // pred_check_branch
          %177 = sbr.rel (%p175) target = $region24
        $region23: #{tpu_custom_call.1} parent=15 // pred_region
          %s178 = sand.u32 %s88, 1
          %s179 = scalar_lea.sflag [#allocation6], %s178
          %s180 = sand.u32 %s88, 1
          %s181 = smul.addr %s180, 2
          %s182 = scalar_lea.vmem [#allocation5], %s181
          %s183 = sadd.s32 %s25, %s26
          %p184 = scmp.lt.s32.totalorder %s183, 0
          %s185 = scalar_select %p184, %s183, 0
          %s186 = smul.u32 2, %s185
          %s188 = ssub.s32 32, 32
          %189 = vsyncadd %s179, %s188
          %s190 = smul.addr %s24, 2
          %s191 = sadd.s32 %s186, %s190
          %s192 = smul.addr %s191, 16
          %s193 = scalar_lea.hbm %s1, %s192
          %s195 = sshll.u32 %s182, 4
          %s196 = int_to_ptr.vmem [resolvable:$true] %s195
          %198 = dma.hbm_to_vmem [thread:$0]  %s193, 32, %s196, %s179
        $region24: #{tpu_custom_call.1} parent=15 // pred_fallthru
          _
      $region16: #{tpu_custom_call.1} parent=5 // pred_fallthru
        _
      %p199 = scmp.le.s32.totalorder 1, %s17
      %p200 = scmp.lt.s32.totalorder %s17, 3
      %p201 = pnand %p199, %p200
      %p202 = pneg %p201
      // Predicated region
      $region25: #{tpu_custom_call.1} parent=5 // pred_check
        _
      $region26: #{tpu_custom_call.1} parent=5 // pred_check_branch
        %204 = sbr.rel (%p201) target = $region28
      $region27: #{tpu_custom_call.1} parent=5 // pred_region
        %s205 = ssub.s32 %s17, 1
        %s206 = sand.u32 %s57, 1
        %s207 = scalar_lea.sflag [#allocation3], %s206
        %s208 = sand.u32 %s57, 1
        %s209 = smul.addr %s208, 8
        %s210 = scalar_lea.vmem [#allocation2], %s209
        // Predicated region
        $region29: #{tpu_custom_call.1} parent=27 // pred_check
          %p211 = pneg %p70
        $region30: #{tpu_custom_call.1} parent=27 // pred_check_branch
          %213 = sbr.rel (%p211) target = $region32
        $region31: #{tpu_custom_call.1} parent=27 // pred_region
          %214 = dma.done %s207, 128
        $region32: #{tpu_custom_call.1} parent=27 // pred_fallthru
          _
        %s215 = sand.u32 %s91, 1
        %s216 = scalar_lea.sflag [#allocation6], %s215
        %s217 = sand.u32 %s91, 1
        %s218 = smul.addr %s217, 2
        %s219 = scalar_lea.vmem [#allocation5], %s218
        // Predicated region
        $region33: #{tpu_custom_call.1} parent=27 // pred_check
          %p220 = pneg %p104
        $region34: #{tpu_custom_call.1} parent=27 // pred_check_branch
          %222 = sbr.rel (%p220) target = $region36
        $region35: #{tpu_custom_call.1} parent=27 // pred_region
          %223 = dma.done %s216, 32
        $region36: #{tpu_custom_call.1} parent=27 // pred_fallthru
          _
        %s224 = sand.u32 %s57, 1
        %s225 = scalar_lea.sflag [#allocation3], %s224
        %s226 = sand.u32 %s57, 1
        %s227 = smul.addr %s226, 8
        %s228 = scalar_lea.vmem [#allocation2], %s227
        %p229 = pneg %p70
        %p230 = pneg %p67
        %s231 = sand.u32 %s91, 1
        %s232 = scalar_lea.sflag [#allocation6], %s231
        %s233 = sand.u32 %s91, 1
        %s234 = smul.addr %s233, 2
        %s235 = scalar_lea.vmem [#allocation5], %s234
        %p236 = pneg %p104
        %p237 = pneg %p101
        %p238 = pneg %p132
        %p239 = pneg %p129
        %s240 = sand.u32 %s119, 1
        %s241 = scalar_lea.sflag [#allocation4], %s240
        %s242 = sand.u32 %s119, 1
        %s243 = smul.addr %s242, 2
        %s244 = scalar_lea.vmem [#allocation7], %s243
        %s245 = sadd.s32 %s28, %s29
        %p246 = scmp.lt.s32.totalorder %s245, 0
        %s247 = scalar_select %p246, %s245, 0
        %s248 = smul.u32 2, %s247
        %s249 = sadd.s32 %s28, %s29
        %p250 = scmp.lt.s32.totalorder %s249, 0
        %s251 = scalar_select %p250, %s249, 0
        %s252 = smul.u32 2, %s251
        %s253 = sadd.s32 %s27, %s28
        %s254 = sadd.s32 %s28, %s29
        %s255 = smul.u32 %s254, 256
        %p256 = scmp.eq.s32.totalorder %s29, 0
        // Predicated region
        $region37: #{tpu_custom_call.1} parent=27 // pred_check
          %p257 = pneg %p256
        $region38: #{tpu_custom_call.1} parent=27 // pred_check_branch
          %259 = sbr.rel (%p257) target = $region40
        $region39: #{tpu_custom_call.1} parent=27 // pred_region
          %v260 = vlaneseq
          %vm261 = vcmp.ge.s32.totalorder %v260, 0
          %vm262 = vcmp.lt.s32.totalorder %v260, 256
          %vm263 = vmand %vm261, %vm262
          %264 = vst.msk [vmem:[%s244] sm:$0x3] %vm263, 0.0
        $region40: #{tpu_custom_call.1} parent=27 // pred_fallthru
          _
        %v265 = vld [vmem:[%s210] sm:$0xff]
        %v266 = vld [vmem:[%s219] sm:$0x3]
        %v268 = vcombine.high %v265, %v265
        %vm270 = vcmask 1043456
        %v271 = vsel %vm270, %v265, -inf
        %v272 = vrot.slane %v271, 4
        %v273 = vmax.f32 %v271, %v272
        %v274 = vrot.slane %v273, 2
        %v275 = vmax.f32 %v273, %v274
        %v276 = vrot.slane %v275, 1
        %v277 = vmax.f32 %v275, %v276
        %v278 = vsel %vm270, %v268, -inf
        %v279 = vrot.slane %v278, 4
        %v280 = vmax.f32 %v278, %v279
        %v281 = vrot.slane %v280, 2
        %v282 = vmax.f32 %v280, %v281
        %v283 = vrot.slane %v282, 1
        %v284 = vmax.f32 %v282, %v283
        %v287 = vcombine.low %v277, %v284
        %v289 = vsub.f32 %v265, %v287
        %v290 = vmul.f32 %v289, 1.442695
        %v291 = vpow.pop %v290
        %v293 = vcombine.high %v291, %v291
        %v295 = vsel %vm270, %v291, 0.0
        %v296 = vrot.slane %v295, 4
        %v297 = vadd.f32 %v295, %v296
        %v298 = vrot.slane %v297, 2
        %v299 = vadd.f32 %v297, %v298
        %v300 = vrot.slane %v299, 1
        %v301 = vadd.f32 %v299, %v300
        %v302 = vsel %vm270, %v293, 0.0
        %v303 = vrot.slane %v302, 4
        %v304 = vadd.f32 %v302, %v303
        %v305 = vrot.slane %v304, 2
        %v306 = vadd.f32 %v304, %v305
        %v307 = vrot.slane %v306, 1
        %v308 = vadd.f32 %v306, %v307
        %v309 = vlaneseq
        %v310 = vshrl.u32 %v309, 7
        %v311 = vlaneseq
        %v312 = vshrl.u32 %v311, 7
        %v313 = vsub.s32 0, %v312
        %v314 = vrot.slane %v266, %v313
        %v315 = vlaneseq
        %v316 = vshrl.u32 %v315, 7
        %v317 = vsub.s32 1, %v316
        %v318 = vrot.slane %v266, %v317
        %vm319 = vcmp.eq.s32.totalorder %v310, %v314
        %vm320 = vcmp.eq.s32.totalorder %v310, %v318
        %v321 = vsel %vm319, %v291, 0.0
        %v322 = vsel %vm320, %v293, 0.0
        %v323 = vsel %vm270, %v321, 0.0
        %v324 = vrot.slane %v323, 4
        %v325 = vadd.f32 %v323, %v324
        %v326 = vrot.slane %v325, 2
        %v327 = vadd.f32 %v325, %v326
        %v328 = vrot.slane %v327, 1
        %v329 = vadd.f32 %v327, %v328
        %v330 = vsel %vm270, %v322, 0.0
        %v331 = vrot.slane %v330, 4
        %v332 = vadd.f32 %v330, %v331
        %v333 = vrot.slane %v332, 2
        %v334 = vadd.f32 %v332, %v333
        %v335 = vrot.slane %v334, 1
        %v336 = vadd.f32 %v334, %v335
        %v337 = vrcp.pop %v301
        %v338 = vrcp.pop %v308
        %v339 = vmul.f32 %v329, %v337
        %v340 = vmul.f32 %v336, %v338
        %s341 = sadd.s32 %s255, 256
        %p342 = scmp.le.s32.totalorder %s341, 256
        // Predicated region
        $region41: #{tpu_custom_call.1} parent=27 // pred_check
          %p343 = pneg %p342
        $region42: #{tpu_custom_call.1} parent=27 // pred_check_branch
          %345 = sbr.rel (%p343) target = $region44
        $region43: #{tpu_custom_call.1} parent=27 // pred_region
          %v346 = vld [vmem:[%s244] sm:$0x3]
          %v349 = vcombine.low %v339, %v340
          %v351 = vunpack.c.l.s4 1966171168
          %v352 = vunpack.c.0.s8 %v351
          %v353 = vlaneseq
          %v354 = vshrl.u32 %v353, 7
          %v355 = vsub.s32 %v352, %v354
          %v356 = vrot.slane %v349, %v355
          %v358 = vunpack.c.l.s4 1966171168
          %v359 = vunpack.c.0.s8 %v358
          %v360 = vlaneseq
          %v361 = vshrl.u32 %v360, 7
          %v362 = vsub.s32 %v359, %v361
          %v363 = vrot.slane %v356, %v362
          %v365 = vadd.f32 %v346, %v363
          %v366 = vlaneseq
          %vm367 = vcmp.ge.s32.totalorder %v366, 0
          %vm368 = vcmp.lt.s32.totalorder %v366, 256
          %vm369 = vmand %vm367, %vm368
          %370 = vst.msk [vmem:[%s244] sm:$0x3] %vm369, %v365
        $region44: #{tpu_custom_call.1} parent=27 // pred_fallthru
          _
        %p371 = scmp.gt.s32.totalorder %s341, 256
        // Predicated region
        $region45: #{tpu_custom_call.1} parent=27 // pred_check
          %p372 = pneg %p371
        $region46: #{tpu_custom_call.1} parent=27 // pred_check_branch
          %374 = sbr.rel (%p372) target = $region48
        $region47: #{tpu_custom_call.1} parent=27 // pred_region
          %v375 = vlaneseq
          %v376 = vand.u32 %v375, 127
          %v377 = vadd.s32 %v376, 128
          %v378 = vstv %s255
          %v379 = vadd.s32 %v378, %v376
          %v380 = vadd.s32 %v378, %v377
          %v381 = vld [vmem:[%s244] sm:$0x3]
          %vm382 = vcmp.lt.s32.totalorder %v379, 256
          %vm383 = vcmp.lt.s32.totalorder %v380, 256
          %v384 = vsel %vm382, %v339, 0.0
          %v385 = vsel %vm383, %v340, 0.0
          %v388 = vcombine.low %v384, %v385
          %v390 = vunpack.c.l.s4 1966171168
          %v391 = vunpack.c.0.s8 %v390
          %v392 = vlaneseq
          %v393 = vshrl.u32 %v392, 7
          %v394 = vsub.s32 %v391, %v393
          %v395 = vrot.slane %v388, %v394
          %v397 = vunpack.c.l.s4 1966171168
          %v398 = vunpack.c.0.s8 %v397
          %v399 = vlaneseq
          %v400 = vshrl.u32 %v399, 7
          %v401 = vsub.s32 %v398, %v400
          %v402 = vrot.slane %v395, %v401
          %v404 = vadd.f32 %v381, %v402
          %v405 = vlaneseq
          %vm406 = vcmp.ge.s32.totalorder %v405, 0
          %vm407 = vcmp.lt.s32.totalorder %v405, 256
          %vm408 = vmand %vm406, %vm407
          %409 = vst.msk [vmem:[%s244] sm:$0x3] %vm408, %v404
        $region48: #{tpu_custom_call.1} parent=27 // pred_fallthru
          _
        %s410 = sand.u32 %s119, 1
        %s411 = scalar_lea.sflag [#allocation4], %s410
        %s412 = sand.u32 %s119, 1
        %s413 = smul.addr %s412, 2
        %s414 = scalar_lea.vmem [#allocation7], %s413
        // Predicated region
        $region49: #{tpu_custom_call.1} parent=27 // pred_check
          %p415 = pneg %p129
        $region50: #{tpu_custom_call.1} parent=27 // pred_check_branch
          %417 = sbr.rel (%p415) target = $region52
        $region51: #{tpu_custom_call.1} parent=27 // pred_region
          %s418 = sadd.s32 %s27, %s28
          %s420 = ssub.s32 32, 32
          %421 = vsyncadd %s411, %s420
          %s422 = smul.addr %s418, 2
          %s423 = smul.addr %s422, 16
          %s424 = scalar_lea.hbm %s2, %s423
          %s426 = sshll.u32 %s414, 4
          %s427 = int_to_ptr.vmem [resolvable:$true] %s426
          %429 = dma.vmem_to_hbm [thread:$0]  %s427, 32, %s424, %s411
        $region52: #{tpu_custom_call.1} parent=27 // pred_fallthru
          _
      $region28: #{tpu_custom_call.1} parent=5 // pred_fallthru
        _
      %p430 = scmp.le.s32.totalorder 2, %s17
      // Predicated region
      $region53: #{tpu_custom_call.1} parent=5 // pred_check
        %p431 = pneg %p430
      $region54: #{tpu_custom_call.1} parent=5 // pred_check_branch
        %433 = sbr.rel (%p431) target = $region56
      $region55: #{tpu_custom_call.1} parent=5 // pred_region
        %s434 = ssub.s32 %s17, 2
        // Predicated region
        $region57: #{tpu_custom_call.1} parent=55 // pred_check
          %p435 = pneg %p135
        $region58: #{tpu_custom_call.1} parent=55 // pred_check_branch
          %437 = sbr.rel (%p435) target = $region60
        $region59: #{tpu_custom_call.1} parent=55 // pred_region
          %s438 = sand.u32 %s120, 1
          %s439 = scalar_lea.sflag [#allocation4], %s438
          %s440 = sand.u32 %s120, 1
          %s441 = smul.addr %s440, 2
          %s442 = scalar_lea.vmem [#allocation7], %s441
          %443 = dma.done %s439, 32
        $region60: #{tpu_custom_call.1} parent=55 // pred_fallthru
          _
      $region56: #{tpu_custom_call.1} parent=5 // pred_fallthru
        _
    $region6: #{tpu_custom_call.1} parent=1 // loop_footer
      %s21 = sadd.s32 1, %s17
    $region7: #{tpu_custom_call.1} parent=1 // loop_footer_branch
      %16 = sbr.rel target = $region3
    $region8: #{tpu_custom_call.1} parent=1 // loop_exit
      _
    %444 = vsyncpa [#allocation3], 1
    %s445 = scalar_lea.sflag [#allocation3], 1
    %446 = vsyncpa %s445, 1
    %447 = vsyncpa [#allocation6], 1
    %s448 = scalar_lea.sflag [#allocation6], 1
    %449 = vsyncpa %s448, 1
    %450 = vsyncpa [#allocation4], 1
    %s451 = scalar_lea.sflag [#allocation4], 1
    %452 = vsyncpa %s451, 1

</llo_original>
